<compile_context>
chip_gen: v5e
topology: v5e:2x2
jax: 0.10.0
libtpu: 0.0.40
codegen_flags: <defaults>
</compile_context>

<pallas_src>
import jax
import jax.numpy as jnp
from jax.experimental import pallas as pl
from jax.experimental.pallas import tpu as pltpu


def _deconv_kernel(x_ref, w_ref, b_ref, o_ref):
    # x_ref: (Cin, TS)       -- spatial on the lane axis (lane-dense)
    # w_ref: (Cout*4, Cin)   -- packed f = o*4 + kh*2 + kw
    # b_ref: (Cout*4, 1)     -- f32 bias, lane-broadcast
    # o_ref: (Cout*4, TS)
    acc = jnp.dot(w_ref[...], x_ref[...], preferred_element_type=jnp.float32)
    o_ref[...] = (acc + b_ref[...]).astype(o_ref.dtype)


def _pick_spatial_tile(hw, cin, cf, itemsize, max_tile, vmem_budget_bytes):
    """Largest 128-aligned spatial tile whose double-buffered pipeline footprint
    (x tile + out tile, plus resident weight/bias) fits the VMEM budget."""
    if hw <= 128:
        return hw  # block == full array dim is always legal
    fixed = 2 * (cf * cin * itemsize + cf * 4)      # weight + bias (double-buffered)
    per_col = 2 * (cin + cf) * itemsize             # x tile + out tile, x2 buffers
    cap = max(128, (vmem_budget_bytes - fixed) // per_col)
    ts = min(int(max_tile), int(hw), int(cap))
    return max(128, (ts // 128) * 128)


def upsample_forward(x_nchw, weight, bias, *,
                     max_spatial_tile=2048,
                     vmem_budget_bytes=32 * 1024 * 1024):
    """ConvTranspose2d(kernel=2, stride=2) forward (== UpSample.forward).

    x_nchw : (B, Cin, H, W)           float32 or bfloat16
    weight : (Cin, Cout, 2, 2)        PyTorch ConvTranspose2d layout
    bias   : (Cout,)
    returns: (B, Cout, 2H, 2W)  in x_nchw.dtype
    """
    B, Cin, H, W = x_nchw.shape
    Cout = weight.shape[1]
    Cf = Cout * 4
    HW = H * W
    dtype = x_nchw.dtype
    itemsize = jnp.dtype(dtype).itemsize

    # Zero-copy reshape (H, W are already the two minor dims of NCHW).
    x3 = x_nchw.reshape(B, Cin, HW)

    # Weight packed as (Cout*4, Cin) with f = o*4 + kh*2 + kw; bias as (Cout*4, 1).
    w2t = jnp.transpose(weight.reshape(Cin, Cf)).astype(dtype)
    b2 = jnp.broadcast_to(bias[:, None], (Cout, 4)).reshape(Cf, 1).astype(jnp.float32)

    ts = _pick_spatial_tile(HW, Cin, Cf, itemsize, max_spatial_tile, vmem_budget_bytes)
    grid = (B, pl.cdiv(HW, ts))

    cost = pl.CostEstimate(
        flops=int(2 * B * HW * Cin * Cf),
        transcendentals=0,
        bytes_accessed=int(itemsize * (B * Cin * HW + Cf * Cin + B * Cf * HW) + 4 * Cf),
    )

    y3 = pl.pallas_call(
        _deconv_kernel,
        out_shape=jax.ShapeDtypeStruct((B, Cf, HW), dtype),
        grid_spec=pltpu.PrefetchScalarGridSpec(
            num_scalar_prefetch=0,
            grid=grid,
            in_specs=[
                # Input block: (Cin, TS) -- lane-dense spatial axis, batch squeezed.
                pl.BlockSpec((None, Cin, ts), lambda b, s: (b, 0, s)),
                # Invariant weight / bias (constant index map -> fetched once).
                pl.BlockSpec((Cf, Cin), lambda b, s: (0, 0)),
                pl.BlockSpec((Cf, 1), lambda b, s: (0, 0)),
            ],
            out_specs=pl.BlockSpec((None, Cf, ts), lambda b, s: (b, 0, s)),
        ),
        compiler_params=pltpu.CompilerParams(
            dimension_semantics=("parallel", "parallel"),
            vmem_limit_bytes=48 * 1024 * 1024,
        ),
        cost_estimate=cost,
    )(x3, w2t, b2)

    # Single remaining layout op: unpack (B, Cout*4, H*W) -> NCHW (B, Cout, 2H, 2W).
    y = y3.reshape(B, Cout, 2, 2, H, W)
    y = jnp.transpose(y, (0, 1, 4, 2, 5, 3))          # (B, Cout, H, 2, W, 2)
    return y.reshape(B, Cout, 2 * H, 2 * W)


def _reference(x, weight, bias):
    """Pure-JAX ConvTranspose2d(k=2, s=2) reference."""
    B, Cin, H, W = x.shape
    Cout = weight.shape[1]
    y = jnp.einsum("bchw,cokl->bohkwl", x, weight)    # (B, Cout, H, 2, W, 2)
    y = y.reshape(B, Cout, 2 * H, 2 * W)
    return y + bias[None, :, None, None]


if __name__ == "__main__":
    key = jax.random.PRNGKey(0)
    k_x, k_w, k_b = jax.random.split(key, 3)

    # Primary demo shape.
    B, Cin, Cout, H, W = 2, 4, 4, 16, 16
    x = jax.random.normal(k_x, (B, Cin, H, W), dtype=jnp.float32)
    weight = jax.random.normal(k_w, (Cin, Cout, 2, 2), dtype=jnp.float32) * 0.1
    bias = jax.random.normal(k_b, (Cout,), dtype=jnp.float32) * 0.1

    out = jax.block_until_ready(upsample_forward(x, weight, bias))
    ref = _reference(x, weight, bias)
    assert out.shape == (B, Cout, 2 * H, 2 * W)
    assert jnp.allclose(out, ref, atol=1e-5, rtol=1e-5)

    # Robustness: odd channel counts + spatial extent that does not divide the
    # tile (exercises pl.cdiv grid + masked ragged tail instead of a hard assert).
    B2, Cin2, Cout2, H2, W2 = 2, 3, 5, 20, 18
    x2 = jax.random.normal(k_x, (B2, Cin2, H2, W2), dtype=jnp.float32)
    w2 = jax.random.normal(k_w, (Cin2, Cout2, 2, 2), dtype=jnp.float32) * 0.1
    b2 = jax.random.normal(k_b, (Cout2,), dtype=jnp.float32) * 0.1
    out2 = jax.block_until_ready(upsample_forward(x2, w2, b2))
    assert jnp.allclose(out2, _reference(x2, w2, b2), atol=1e-5, rtol=1e-5)

    # bf16 path (production advice: halves HBM bytes; accumulation stays f32).
    out_bf16 = jax.block_until_ready(
        upsample_forward(x.astype(jnp.bfloat16), weight.astype(jnp.bfloat16), bias))
    assert jnp.allclose(out_bf16.astype(jnp.float32), ref, atol=3e-2, rtol=3e-2)

    print("KERNEL_OK")
</pallas_src>

<mosaic_0001>
module attributes {stable_mosaic.version = 11 : i64} {
  func.func @_deconv_kernel(%arg0: i32, %arg1: i32, %arg2: memref<1x4x256xf32, #tpu.memory_space<vmem>>, %arg3: memref<16x4xf32, #tpu.memory_space<vmem>>, %arg4: memref<16x1xf32, #tpu.memory_space<vmem>>, %arg5: memref<1x16x256xf32, #tpu.memory_space<vmem>>) attributes {dimension_semantics = [#tpu.dimension_semantics<parallel>, #tpu.dimension_semantics<parallel>], iteration_bounds = array<i64: 2, 1>, scalar_prefetch = 0 : i64, scratch_operands = 0 : i64, tpu.core_type = #tpu.core_type<tc>, window_params = [{transform_indices = @transform_0, window_bounds = array<i64: 1, 4, 256>}, {pipeline_mode = #tpu.pipeline_mode<synchronous>, transform_indices = @transform_1, window_bounds = array<i64: 16, 4>}, {pipeline_mode = #tpu.pipeline_mode<synchronous>, transform_indices = @transform_2, window_bounds = array<i64: 16, 1>}, {transform_indices = @transform_3, window_bounds = array<i64: 1, 16, 256>}]} {
    %c0 = arith.constant 0 : index
    %c0_0 = arith.constant 0 : index
    %0 = vector.load %arg3[%c0, %c0_0] : memref<16x4xf32, #tpu.memory_space<vmem>>, vector<16x4xf32>
    %c0_1 = arith.constant 0 : index
    %c0_2 = arith.constant 0 : index
    %c0_3 = arith.constant 0 : index
    %1 = vector.load %arg2[%c0_1, %c0_2, %c0_3] : memref<1x4x256xf32, #tpu.memory_space<vmem>>, vector<1x4x256xf32>
    %2 = vector.shape_cast %1 : vector<1x4x256xf32> to vector<4x256xf32>
    %cst = arith.constant dense<0.000000e+00> : vector<16x256xf32>
    %3 = tpu.matmul %0, %2, %cst {dimension_numbers = #tpu.dot_dimension_numbers<[1], [0], [0], [1], [0, 0, 1, 1], [], []>} : vector<16x4xf32>, vector<4x256xf32>, vector<16x256xf32> -> vector<16x256xf32>
    %c0_4 = arith.constant 0 : index
    %c0_5 = arith.constant 0 : index
    %4 = vector.load %arg4[%c0_4, %c0_5] : memref<16x1xf32, #tpu.memory_space<vmem>>, vector<16x1xf32>
    %5 = vector.broadcast %4 : vector<16x1xf32> to vector<16x256xf32>
    %6 = arith.addf %3, %5 : vector<16x256xf32>
    %c0_6 = arith.constant 0 : index
    %c0_7 = arith.constant 0 : index
    %c0_8 = arith.constant 0 : index
    %7 = vector.load %arg5[%c0_6, %c0_7, %c0_8] : memref<1x16x256xf32, #tpu.memory_space<vmem>>, vector<1x16x256xf32>
    %8 = vector.shape_cast %7 : vector<1x16x256xf32> to vector<16x256xf32>
    %9 = vector.shape_cast %6 : vector<16x256xf32> to vector<1x16x256xf32>
    tpu.vector_store %arg5[%c0_6, %c0_7, %c0_8], %9 {strides = array<i32>} : memref<1x16x256xf32, #tpu.memory_space<vmem>>, vector<1x16x256xf32>,
    return
  }
  func.func @transform_0(%arg0: i32, %arg1: i32) -> (i32, i32, i32) {
    %c0_i32 = arith.constant 0 : i32
    %c0_i32_0 = arith.constant 0 : i32
    return %arg0, %c0_i32, %arg1 : i32, i32, i32
  }
  func.func @transform_1(%arg0: i32, %arg1: i32) -> (i32, i32) {
    %c0_i32 = arith.constant 0 : i32
    %c0_i32_0 = arith.constant 0 : i32
    %c0_i32_1 = arith.constant 0 : i32
    return %c0_i32, %c0_i32_0 : i32, i32
  }
  func.func @transform_2(%arg0: i32, %arg1: i32) -> (i32, i32) {
    %c0_i32 = arith.constant 0 : i32
    %c0_i32_0 = arith.constant 0 : i32
    %c0_i32_1 = arith.constant 0 : i32
    return %c0_i32, %c0_i32_0 : i32, i32
  }
  func.func @transform_3(%arg0: i32, %arg1: i32) -> (i32, i32, i32) {
    %c0_i32 = arith.constant 0 : i32
    %c0_i32_0 = arith.constant 0 : i32
    return %arg0, %c0_i32, %arg1 : i32, i32, i32
  }
}

</mosaic_0001>

<llo_original>
// kernel: tpu_custom_call.1
$region0: #{tpu_custom_call.1}
  #allocation0 [shape = 'u32[]', space=smem, size = 0x4, offset = 0x4, fixed_abs, tag = 'smem constant byte address 0x4 - core index']
  #allocation1 [shape = 'u32[72,128]{1,0:T(1,128)}', space=vmem, size = 0x9000, scoped, tag = 'internal scratch']
  %s0 = inlined_call_operand.vmem [shape: f32[2,4,256], index: 0, kind: input, shape index: {}]
  %s1 = inlined_call_operand.vmem [shape: f32[16,4], index: 1, kind: input, shape index: {}]
  %s2 = inlined_call_operand.vmem [shape: f32[16,1], index: 2, kind: input, shape index: {}]
  %s3 = inlined_call_operand.hbm [shape: f32[2,16,256], index: 3, kind: output, shape index: {}]
  %s4 = sld [smem:[#allocation0]]
  $region45: #{tpu_custom_call.1} parent=0
    _
  %s6 = ssub.s32 1, %s4
  %s7 = scalar_select 0, %s6, %s4
  $region1: #{tpu_custom_call.1} parent=0
    #allocation2 [shape = 'u8[32768]{0}', space=vmem, size = 0x8000, scoped, tag = 'output window, operand 0']
    #allocation3 [shape = 's32[2]{0}', space=sflag, size = 0x8, scoped, tag = 'scoped memory for tpu_custom_call.1']
    %8 = vsyncpa [#allocation3], 0
    %s9 = scalar_lea.sflag [#allocation3], 1
    %10 = vsyncpa %s9, 0
    loop: start=0, step=1, limit=4
    $region2: #{tpu_custom_call.1} parent=1 // loop_pre_header
      _
    $region3: #{tpu_custom_call.1} parent=1 // loop_header
      %s12 = sphi 0, %s16
      %p13 = scmp.ge.s32.totalorder %s12, 4
      %s19 = sphi 0, %s31
      %s20 = sphi 0, %s27
      %s21 = sphi 0, %s19
      %s22 = sphi 0, %s20
      %s23 = sphi 0, %s21
      %s24 = sphi 0, %s22
      %s36 = sphi 0, %s38
      %s39 = sphi 0, %s36
      %s40 = sphi 0, %s39
      %s56 = sphi 0, %s40
      %s60 = sphi 0, %s60
      %s62 = sphi 0, %s60
      %s63 = sphi 0, %s62
      %s77 = sphi 0, %s63
      %s81 = sphi 0, %s81
      %s83 = sphi 0, %s81
      %s84 = sphi 0, %s83
      %s98 = sphi 0, %s84
      %s106 = sphi 0, %s108
      %s109 = sphi 0, %s106
      %s110 = sphi 0, %s109
      %s126 = sphi 0, %s110
    $region4: #{tpu_custom_call.1} parent=1 // loop_header_branch
      %15 = sbr.rel (%p13) target = $region8
    $region5: #{tpu_custom_call.1} parent=1 // loop_body
      %s17 = ssub.s32 %s12, 1
      %s18 = ssub.s32 %s12, 2
      %s25 = sadd.s32 1, %s20
      %p26 = scmp.ge.s32.totalorder %s25, 1
      %s27 = scalar_select %p26, 0, %s25
      %s28 = sadd.s32 1, %s19
      %s29 = scalar_select %p26, %s28, %s19
      %p30 = scmp.ge.s32.totalorder %s29, 2
      %s31 = scalar_select %p30, 0, %s29
      %s32 = ssub.s32 %s19, %s31
      %s33 = ssub.s32 %s20, %s27
      %s34 = sor.u32 %s32, %s33
      %p35 = scmp.eq.s32.totalorder %s34, 0
      %s37 = sadd.s32 %s36, 1
      %s38 = scalar_select %p35, %s36, %s37
      %p41 = pneg %p35
      %p42 = scmp.eq.s32.totalorder %s12, 1
      %p43 = por %p41, %p42
      %p44 = scmp.ne.s32.totalorder %s36, %s39
      %p45 = scmp.eq.s32.totalorder %s12, 0
      %p46 = por %p44, %p45
      %p47 = scmp.ne.s32.totalorder %s36, %s39
      %p48 = scmp.eq.s32.totalorder %s17, 1
      %p49 = por %p47, %p48
      %p50 = scmp.ne.s32.totalorder %s39, %s40
      %p51 = scmp.eq.s32.totalorder %s17, 0
      %p52 = por %p50, %p51
      %p53 = scmp.ne.s32.totalorder %s39, %s40
      %p54 = scmp.eq.s32.totalorder %s18, 1
      %p55 = por %p53, %p54
      %p57 = scmp.ne.s32.totalorder %s40, %s56
      %p58 = scmp.eq.s32.totalorder %s18, 0
      %p59 = por %p57, %p58
      %s61 = sadd.s32 %s60, 1
      %p64 = scmp.eq.s32.totalorder %s12, 1
      %p65 = scmp.ne.s32.totalorder %s60, %s62
      %p66 = scmp.eq.s32.totalorder %s12, 0
      %p67 = por %p65, %p66
      %p68 = scmp.ne.s32.totalorder %s60, %s62
      %p69 = scmp.eq.s32.totalorder %s17, 1
      %p70 = por %p68, %p69
      %p71 = scmp.ne.s32.totalorder %s62, %s63
      %p72 = scmp.eq.s32.totalorder %s17, 0
      %p73 = por %p71, %p72
      %p74 = scmp.ne.s32.totalorder %s62, %s63
      %p75 = scmp.eq.s32.totalorder %s18, 1
      %p76 = por %p74, %p75
      %p78 = scmp.ne.s32.totalorder %s63, %s77
      %p79 = scmp.eq.s32.totalorder %s18, 0
      %p80 = por %p78, %p79
      %s82 = sadd.s32 %s81, 1
      %p85 = scmp.eq.s32.totalorder %s12, 1
      %p86 = scmp.ne.s32.totalorder %s81, %s83
      %p87 = scmp.eq.s32.totalorder %s12, 0
      %p88 = por %p86, %p87
      %p89 = scmp.ne.s32.totalorder %s81, %s83
      %p90 = scmp.eq.s32.totalorder %s17, 1
      %p91 = por %p89, %p90
      %p92 = scmp.ne.s32.totalorder %s83, %s84
      %p93 = scmp.eq.s32.totalorder %s17, 0
      %p94 = por %p92, %p93
      %p95 = scmp.ne.s32.totalorder %s83, %s84
      %p96 = scmp.eq.s32.totalorder %s18, 1
      %p97 = por %p95, %p96
      %p99 = scmp.ne.s32.totalorder %s84, %s98
      %p100 = scmp.eq.s32.totalorder %s18, 0
      %p101 = por %p99, %p100
      %s102 = ssub.s32 %s19, %s31
      %s103 = ssub.s32 %s20, %s27
      %s104 = sor.u32 %s102, %s103
      %p105 = scmp.eq.s32.totalorder %s104, 0
      %s107 = sadd.s32 %s106, 1
      %s108 = scalar_select %p105, %s106, %s107
      %p111 = pneg %p105
      %p112 = scmp.eq.s32.totalorder %s12, 1
      %p113 = por %p111, %p112
      %p114 = scmp.ne.s32.totalorder %s106, %s109
      %p115 = scmp.eq.s32.totalorder %s12, 0
      %p116 = por %p114, %p115
      %p117 = scmp.ne.s32.totalorder %s106, %s109
      %p118 = scmp.eq.s32.totalorder %s17, 1
      %p119 = por %p117, %p118
      %p120 = scmp.ne.s32.totalorder %s109, %s110
      %p121 = scmp.eq.s32.totalorder %s17, 0
      %p122 = por %p120, %p121
      %p123 = scmp.ne.s32.totalorder %s109, %s110
      %p124 = scmp.eq.s32.totalorder %s18, 1
      %p125 = por %p123, %p124
      %p127 = scmp.ne.s32.totalorder %s110, %s126
      %p128 = scmp.eq.s32.totalorder %s18, 0
      %p129 = por %p127, %p128
      %p130 = scmp.le.s32.totalorder 1, %s12
      %p131 = scmp.lt.s32.totalorder %s12, 3
      %p132 = pnand %p130, %p131
      %p133 = pneg %p132
      // Predicated region
      $region9: #{tpu_custom_call.1} parent=5 // pred_check
        _
      $region10: #{tpu_custom_call.1} parent=5 // pred_check_branch
        %135 = sbr.rel (%p132) target = $region12
      $region11: #{tpu_custom_call.1} parent=5 // pred_region
        %s136 = ssub.s32 %s12, 1
        // Predicated region
        $region13: #{tpu_custom_call.1} parent=11 // pred_check
          %p137 = pneg %p73
        $region14: #{tpu_custom_call.1} parent=11 // pred_check_branch
          %139 = sbr.rel (%p137) target = $region16
        $region15: #{tpu_custom_call.1} parent=11 // pred_region
          _
        $region16: #{tpu_custom_call.1} parent=11 // pred_fallthru
          _
        // Predicated region
        $region17: #{tpu_custom_call.1} parent=11 // pred_check
          %p140 = pneg %p94
        $region18: #{tpu_custom_call.1} parent=11 // pred_check_branch
          %142 = sbr.rel (%p140) target = $region20
        $region19: #{tpu_custom_call.1} parent=11 // pred_region
          _
        $region20: #{tpu_custom_call.1} parent=11 // pred_fallthru
          _
      $region12: #{tpu_custom_call.1} parent=5 // pred_fallthru
        _
      %p143 = scmp.lt.s32.totalorder %s12, 2
      // Predicated region
      $region21: #{tpu_custom_call.1} parent=5 // pred_check
        %p144 = pneg %p143
      $region22: #{tpu_custom_call.1} parent=5 // pred_check_branch
        %146 = sbr.rel (%p144) target = $region24
      $region23: #{tpu_custom_call.1} parent=5 // pred_region
        // Predicated region
        $region25: #{tpu_custom_call.1} parent=23 // pred_check
          %p147 = pneg %p46
        $region26: #{tpu_custom_call.1} parent=23 // pred_check_branch
          %149 = sbr.rel (%p147) target = $region28
        $region27: #{tpu_custom_call.1} parent=23 // pred_region
          %s150 = smul.u32 2, %s20
          %p151 = scmp.lt.s32.totalorder %s19, 1
          %s152 = scalar_select %p151, %s19, 1
          %p153 = scmp.lt.s32.totalorder %s150, 1
          %s154 = scalar_select %p153, %s150, 1
          %s155 = smul.addr %s152, 2
          %s156 = sadd.s32 %s154, %s155
          %s157 = smul.addr %s156, 4
          %s158 = scalar_lea.vmem %s0, %s157
          %s159 = smul.u32 2, %s20
        $region28: #{tpu_custom_call.1} parent=23 // pred_fallthru
          _
      $region24: #{tpu_custom_call.1} parent=5 // pred_fallthru
        _
      %p160 = scmp.le.s32.totalorder 1, %s12
      %p161 = scmp.lt.s32.totalorder %s12, 3
      %p162 = pnand %p160, %p161
      %p163 = pneg %p162
      // Predicated region
      $region29: #{tpu_custom_call.1} parent=5 // pred_check
        _
      $region30: #{tpu_custom_call.1} parent=5 // pred_check_branch
        %165 = sbr.rel (%p162) target = $region32
      $region31: #{tpu_custom_call.1} parent=5 // pred_region
        %s166 = ssub.s32 %s12, 1
        %s167 = smul.u32 2, %s22
        %p168 = scmp.lt.s32.totalorder %s21, 1
        %s169 = scalar_select %p168, %s21, 1
        %p170 = scmp.lt.s32.totalorder %s167, 1
        %s171 = scalar_select %p170, %s167, 1
        %s172 = smul.addr %s169, 2
        %s173 = sadd.s32 %s171, %s172
        %s174 = smul.addr %s173, 4
        %s175 = scalar_lea.vmem %s0, %s174
        %p176 = pneg %p52
        %p177 = pneg %p49
        %p178 = pneg %p73
        %p179 = pneg %p70
        %p180 = pneg %p94
        %p181 = pneg %p91
        %p182 = pneg %p122
        %p183 = pneg %p119
        %s184 = sand.u32 %s109, 1
        %s185 = scalar_lea.sflag [#allocation3], %s184
        %s186 = sand.u32 %s109, 1
        %s187 = smul.addr %s186, 32
        %s188 = scalar_lea.vmem [#allocation2], %s187
        %s189 = smul.u32 2, %s22
        %p190 = scmp.lt.s32.totalorder %s21, 1
        %s191 = scalar_select %p190, %s21, 1
        %p192 = scmp.lt.s32.totalorder %s189, 1
        %s193 = scalar_select %p192, %s189, 1
        %s194 = smul.addr %s191, 2
        %s195 = sadd.s32 %s193, %s194
        %s196 = smul.addr %s195, 4
        %s197 = scalar_lea.vmem %s0, %s196
        %s198 = smul.u32 2, %s22
        %s199 = smul.u32 2, %s22
        %v200 = vld [vmem:[%s1] sm:$0xff]
        %v201 = vld [vmem:[%s1 + $0x8] sm:$0xff]
        %v202 = vld [vmem:[%s197] sm:$0xff]
        %v203 = vld [vmem:[%s2] sm:$0xff]
        %v204 = vld [vmem:[%s2 + $0x8] sm:$0xff]
        %206 = vset.pattern.permute.xlu0 0
        %207 = vperm.xlu0 %206, %v203
        %v208 = vpop.permute.xlu0 %207
        %211 = vset.pattern.permute.xlu0 0
        %212 = vperm.xlu0 %211, %v204
        %v213 = vpop.permute.xlu0 %212
        %216 = vst [vmem:[#allocation1] ss:$2 sm:$0xff] %v202
        %v217 = vld.sshfl [vmem:[#allocation1] sm:$0xff pattern:$0x75316420]
        %v218 = vld.sshfl [vmem:[#allocation1 + $0x8] sm:$0xff pattern:$0x75316420]
        %vm219 = vcmask 31744
        %v221 = vsel %vm219, %v200, 0
        %v224 = vsel %vm219, %v201, 0
        %vm226 = vcmask 1043456
        %v227 = vsel %vm226, %v217, 0
        %v229 = vsel %vm226, %v218, 0
        %231 = vmatpush.msra.mxu0 0.0
        %232 = vmatpush.msra.mxu0 0.0
        %233 = vmatpush.msra.mxu0 0.0
        %234 = vmatpush.msra.mxu0 0.0
        %235 = vmatpush.msra.mxu0 0.0
        %236 = vmatpush.msra.mxu0 0.0
        %237 = vmatpush.msra.mxu0 0.0
        %238 = vmatpush.msra.mxu0 0.0
        %239 = vmatpush.msra.mxu0 0.0
        %240 = vmatpush.msra.mxu0 0.0
        %241 = vmatpush.msra.mxu0 0.0
        %242 = vmatpush.msra.mxu0 0.0
        %243 = vmatpush.msra.mxu0 0.0
        %244 = vmatpush.msra.mxu0 0.0
        %245 = vmatpush.msra.mxu0 0.0
        %246 = vmatpush.msra.mxu0 %v227
        %247 = vmatmul.f32.gmra.mxu0 %v221
        %v248 = vpop.f32.mrf.mxu0
        %v249 = vadd.f32 %v208, %v248
        %250 = vmatmul.f32.gmra.mxu0 %v224
        %v251 = vpop.f32.mrf.mxu0
        %v252 = vadd.f32 %v213, %v251
        %253 = vdwg.mxu0
        %254 = vmatpush.msra.mxu0 0.0
        %255 = vmatpush.msra.mxu0 0.0
        %256 = vmatpush.msra.mxu0 0.0
        %257 = vmatpush.msra.mxu0 0.0
        %258 = vmatpush.msra.mxu0 0.0
        %259 = vmatpush.msra.mxu0 0.0
        %260 = vmatpush.msra.mxu0 0.0
        %261 = vmatpush.msra.mxu0 0.0
        %262 = vmatpush.msra.mxu0 0.0
        %263 = vmatpush.msra.mxu0 0.0
        %264 = vmatpush.msra.mxu0 0.0
        %265 = vmatpush.msra.mxu0 0.0
        %266 = vmatpush.msra.mxu0 0.0
        %267 = vmatpush.msra.mxu0 0.0
        %268 = vmatpush.msra.mxu0 0.0
        %269 = vmatpush.msra.mxu0 %v229
        %270 = vmatmul.f32.gmra.mxu0 %v221
        %v271 = vpop.f32.mrf.mxu0
        %v272 = vadd.f32 %v208, %v271
        %273 = vmatmul.f32.gmra.mxu0 %v224
        %v274 = vpop.f32.mrf.mxu0
        %v275 = vadd.f32 %v213, %v274
        %276 = vdwg.mxu0
        %277 = vst [vmem:[%s188] sm:$0xff] %v249
        %278 = vst [vmem:[%s188 + $0x8] sm:$0xff] %v272
        %279 = vst [vmem:[%s188 + $0x10] sm:$0xff] %v252
        %280 = vst [vmem:[%s188 + $0x18] sm:$0xff] %v275
        %s281 = sand.u32 %s109, 1
        %s282 = scalar_lea.sflag [#allocation3], %s281
        %s283 = sand.u32 %s109, 1
        %s284 = smul.addr %s283, 32
        %s285 = scalar_lea.vmem [#allocation2], %s284
        // Predicated region
        $region33: #{tpu_custom_call.1} parent=31 // pred_check
          %p286 = pneg %p119
        $region34: #{tpu_custom_call.1} parent=31 // pred_check_branch
          %288 = sbr.rel (%p286) target = $region36
        $region35: #{tpu_custom_call.1} parent=31 // pred_region
          %s289 = smul.u32 2, %s22
          %291 = vsyncadd %s282, 0
          %s292 = smul.addr %s21, 4
          %s293 = sadd.s32 %s289, %s292
          %s294 = smul.addr %s293, 8
          %s295 = scalar_lea.hbm %s3, %s294
          %s296 = sshll.u32 %s285, 4
          %s297 = int_to_ptr.vmem [resolvable:$true] %s296
          %s298 = sshll.u32 %s295, 4
          %s299 = int_to_ptr.hbm [resolvable:$true] %s298
          %304 = dma.vmem_to_hbm [thread:$0]  %s297, 512, %s299, %s282, 256, 256, 16
        $region36: #{tpu_custom_call.1} parent=31 // pred_fallthru
          _
      $region32: #{tpu_custom_call.1} parent=5 // pred_fallthru
        _
      %p305 = scmp.le.s32.totalorder 2, %s12
      // Predicated region
      $region37: #{tpu_custom_call.1} parent=5 // pred_check
        %p306 = pneg %p305
      $region38: #{tpu_custom_call.1} parent=5 // pred_check_branch
        %308 = sbr.rel (%p306) target = $region40
      $region39: #{tpu_custom_call.1} parent=5 // pred_region
        %s309 = ssub.s32 %s12, 2
        // Predicated region
        $region41: #{tpu_custom_call.1} parent=39 // pred_check
          %p310 = pneg %p125
        $region42: #{tpu_custom_call.1} parent=39 // pred_check_branch
          %312 = sbr.rel (%p310) target = $region44
        $region43: #{tpu_custom_call.1} parent=39 // pred_region
          %s313 = sand.u32 %s110, 1
          %s314 = scalar_lea.sflag [#allocation3], %s313
          %s315 = sand.u32 %s110, 1
          %s316 = smul.addr %s315, 32
          %s317 = scalar_lea.vmem [#allocation2], %s316
          %319 = dma.done %s314, 512
        $region44: #{tpu_custom_call.1} parent=39 // pred_fallthru
          _
      $region40: #{tpu_custom_call.1} parent=5 // pred_fallthru
        _
    $region6: #{tpu_custom_call.1} parent=1 // loop_footer
      %s16 = sadd.s32 1, %s12
    $region7: #{tpu_custom_call.1} parent=1 // loop_footer_branch
      %11 = sbr.rel target = $region3
    $region8: #{tpu_custom_call.1} parent=1 // loop_exit
      _
    %320 = vsyncpa [#allocation3], 1
    %s321 = scalar_lea.sflag [#allocation3], 1
    %322 = vsyncpa %s321, 1

</llo_original>
